<compile_context>
chip_gen: v5e
topology: v5e:2x2
jax: 0.10.0
libtpu: 0.0.40
codegen_flags: <defaults>
</compile_context>

<pallas_src>
import functools

import jax
import jax.numpy as jnp
from jax.experimental import pallas as pl
from jax.experimental.pallas import tpu as pltpu


def _round_up(x, m):
    return ((x + m - 1) // m) * m


def _pad_to(x, shape):
    return jnp.pad(x, [(0, s - d) for d, s in zip(x.shape, shape)])


# ---------------- pass 0: xw = h @ [W_gcn_0 | ... | W_gcn_{P-1}] -----------------

def _xw_kernel(h_ref, wcat_ref, xw_ref):
    xw_ref[...] = jnp.dot(h_ref[...], wcat_ref[...],
                          preferred_element_type=jnp.float32).astype(xw_ref.dtype)


# ------ pass 1: tiled adj @ xw + bias + PReLU + bf16 emb + score partials --------

def _gcn_score_kernel(P, n_actual, tr, tk, dp,
                      adj_ref, xw_ref, bg_ref, alpha_ref, wfc_ref, bfc_ref,
                      att_ref, emb_ref, psum_ref, acc_ref):
    i = pl.program_id(0)
    k = pl.program_id(1)
    nk = pl.num_programs(1)

    @pl.when(k == 0)
    def _init():
        acc_ref[...] = jnp.zeros_like(acc_ref)

    # xw is VMEM-resident; slice its k-th row block and p-th feature block
    # (column slice is static, row start is a multiple of the k tile).
    k0 = pl.multiple_of(k * tk, tk)
    for p in range(P):                               # static unroll, P is small
        xw_p = xw_ref[pl.ds(k0, tk), pl.ds(p * dp, dp)]
        acc_ref[p] += jnp.dot(adj_ref[p], xw_p,
                              preferred_element_type=jnp.float32)

    @pl.when(k == nk - 1)
    def _finalize():
        row = i * tr + jax.lax.broadcasted_iota(jnp.int32, (tr, 1), 0)
        valid = row < n_actual
        for p in range(P):
            out = acc_ref[p] + bg_ref[p]                   # GCN bias
            alpha = alpha_ref[p]                           # PReLU slope (SMEM)
            emb = jnp.where(out >= 0.0, out, alpha * out)  # PReLU (f32)
            emb_ref[p] = emb.astype(emb_ref.dtype)         # bf16 writeback

            # semantic-attention partial: sum over this row tile of
            # att * tanh(fc(emb)); bf16 MXU operands, f32 accumulation.
            s = jnp.tanh(jnp.dot(emb.astype(jnp.bfloat16), wfc_ref[...],
                                 preferred_element_type=jnp.float32)
                         + bfc_ref[...])
            contrib = jnp.where(valid, s * att_ref[...], 0.0)
            psum_ref[0, p] = jnp.sum(contrib, axis=0, keepdims=True)


# ----------------------- pass 2: z = sum_p beta_p * emb_p ------------------------

def _weighted_sum_kernel(P, beta_ref, emb_ref, z_ref):
    acc = beta_ref[0] * emb_ref[0].astype(jnp.float32)
    for p in range(1, P):                            # static unroll
        acc = acc + beta_ref[p] * emb_ref[p].astype(jnp.float32)
    z_ref[...] = acc


def mp_encoder_forward(h, adjs, params):
    """h: [N, D] f32, adjs: [P, N, N] f32 dense (row-normalized) adjacency stack."""
    P, N, _ = adjs.shape
    D = h.shape[1]

    DP = _round_up(D, 128)                 # lane-dense hidden dim
    PD = P * DP

    TR = min(512, _round_up(N, 128))       # row tile
    N_pad = _round_up(N, TR)
    TK = TR                                # adj k tile: grow to 1-2K if it divides
    for mult in (2, 4):
        cand = TR * mult
        if cand <= 2048 and N_pad % cand == 0:
            TK = cand
    NTR, NK = N_pad // TR, N_pad // TK

    # ---- pad / cast inputs (zero padding is exact for this computation) ----
    h_p = _pad_to(h, (N_pad, DP)).astype(jnp.bfloat16)
    adj_p = _pad_to(adjs, (P, N_pad, N_pad)).astype(jnp.bfloat16)
    wg_p = _pad_to(params["w_gcn_t"], (P, DP, DP)).astype(jnp.bfloat16)
    wcat = jnp.transpose(wg_p, (1, 0, 2)).reshape(DP, PD)   # [DP, P*DP]
    bg_p = _pad_to(params["b_gcn"], (P, 1, DP))
    wfc_p = _pad_to(params["w_fc_t"], (DP, DP)).astype(jnp.bfloat16)
    bfc_p = _pad_to(params["b_fc"], (1, DP))
    att_p = _pad_to(params["att"], (1, DP))
    alpha = params["alpha"].reshape(P).astype(jnp.float32)

    # ---- pass 0: all-metapath feature transform (h streamed exactly once) ----
    xw = pl.pallas_call(
        _xw_kernel,
        out_shape=jax.ShapeDtypeStruct((N_pad, PD), jnp.bfloat16),
        grid=(NTR,),
        in_specs=[pl.BlockSpec((TR, DP), lambda i: (i, 0)),
                  pl.BlockSpec((DP, PD), lambda i: (0, 0))],
        out_specs=pl.BlockSpec((TR, PD), lambda i: (i, 0)),
        compiler_params=pltpu.CompilerParams(
            dimension_semantics=("parallel",)),
    )(h_p, wcat)

    # ---- pass 1: tiled GCN aggregation + PReLU + attention-score partials ----
    # VMEM budget: double-buffered inputs/outputs + single accumulator scratch.
    adj_blk = P * TR * TK * 2
    xw_res = N_pad * PD * 2
    emb_blk = P * TR * DP * 2
    psum_blk = P * DP * 4
    const_blk = DP * DP * 2 + (P * DP + 2 * DP) * 4
    acc_bytes = P * TR * DP * 4
    vmem_need = 2 * (adj_blk + xw_res + emb_blk + psum_blk + const_blk) + acc_bytes
    # Cap leaves headroom on 128 MiB chips; v7x (64 MiB physical) needs the
    # streaming-xw fallback (see TODO above) once vmem_need outgrows ~48 MiB.
    vmem_limit = int(min(max(1.2 * vmem_need, 32 * 1024 * 1024), 96 * 1024 * 1024))

    emb, psum = pl.pallas_call(
        functools.partial(_gcn_score_kernel, P, N, TR, TK, DP),
        out_shape=(jax.ShapeDtypeStruct((P, N_pad, DP), jnp.bfloat16),
                   jax.ShapeDtypeStruct((NTR, P, 1, DP), jnp.float32)),
        grid=(NTR, NK),
        in_specs=[
            pl.BlockSpec((P, TR, TK), lambda i, k: (0, i, k)),    # adj tiles (all P)
            pl.BlockSpec((N_pad, PD), lambda i, k: (0, 0)),       # xw, VMEM-resident
            pl.BlockSpec((P, 1, DP), lambda i, k: (0, 0, 0)),     # gcn bias
            pl.BlockSpec(memory_space=pltpu.MemorySpace.SMEM),    # prelu alpha
            pl.BlockSpec((DP, DP), lambda i, k: (0, 0)),          # W_fc (bf16)
            pl.BlockSpec((1, DP), lambda i, k: (0, 0)),           # b_fc
            pl.BlockSpec((1, DP), lambda i, k: (0, 0)),           # att
        ],
        out_specs=(
            pl.BlockSpec((P, TR, DP), lambda i, k: (0, i, 0)),        # emb (bf16)
            pl.BlockSpec((1, P, 1, DP), lambda i, k: (i, 0, 0, 0)),   # score partials
        ),
        scratch_shapes=[pltpu.VMEM((P, TR, DP), jnp.float32)],
        compiler_params=pltpu.CompilerParams(
            dimension_semantics=("parallel", "arbitrary"),
            vmem_limit_bytes=vmem_limit),
        cost_estimate=pl.CostEstimate(
            flops=2 * P * N_pad * N_pad * DP + 2 * P * N_pad * DP * DP,
            transcendentals=P * N_pad * DP,
            bytes_accessed=(P * N_pad * N_pad * 2        # adj (bf16), read once
                            + N_pad * PD * 2             # xw resident, read once
                            + P * N_pad * DP * 2         # emb writeback (bf16)
                            + NTR * P * DP * 4           # score partials
                            + DP * DP * 2 + 4 * P * DP)),
    )(adj_p, xw, bg_p, alpha, wfc_p, bfc_p, att_p)

    # ---- semantic attention: softmax over P scalars (tiny, plain JAX) ----
    scores = jnp.sum(psum, axis=(0, 2, 3)) / N       # true-N mean; att already applied
    beta = jax.nn.softmax(scores)

    # ---- pass 2: beta-weighted combination of the (bf16) metapath embeddings ----
    z_pad = pl.pallas_call(
        functools.partial(_weighted_sum_kernel, P),
        out_shape=jax.ShapeDtypeStruct((N_pad, DP), jnp.float32),
        grid=(NTR,),
        in_specs=[pl.BlockSpec(memory_space=pltpu.MemorySpace.SMEM),   # beta
                  pl.BlockSpec((P, TR, DP), lambda i: (0, i, 0))],     # emb (bf16)
        out_specs=pl.BlockSpec((TR, DP), lambda i: (i, 0)),
        compiler_params=pltpu.CompilerParams(
            dimension_semantics=("parallel",)),
    )(beta, emb)

    return z_pad[:N, :D], beta


def init_params(key, P, D):
    """Deterministic synthetic init mirroring the torch module's shapes."""
    k_gcn, k_fc, k_att = jax.random.split(key, 3)
    gain = 1.414
    # xavier_normal: std = gain * sqrt(2 / (fan_in + fan_out))
    std_dd = gain * (2.0 / (D + D)) ** 0.5
    std_att = gain * (2.0 / (1 + D)) ** 0.5
    w_gcn = jax.random.normal(k_gcn, (P, D, D), jnp.float32) * std_dd   # torch [out,in]
    w_fc = jax.random.normal(k_fc, (D, D), jnp.float32) * std_dd        # torch [out,in]
    att = jax.random.normal(k_att, (1, D), jnp.float32) * std_att
    return {
        # pre-transpose Linear weights so kernels compute x @ W
        "w_gcn_t": jnp.transpose(w_gcn, (0, 2, 1)),           # [P, D, D]
        "b_gcn": jnp.zeros((P, 1, D), jnp.float32),           # GCN bias, filled 0
        "alpha": jnp.full((P,), 0.25, jnp.float32),           # nn.PReLU() default
        "w_fc_t": jnp.transpose(w_fc, (1, 0)),                # [D, D]
        "b_fc": jnp.zeros((1, D), jnp.float32),               # fc bias, filled 0
        "att": att,                                           # [1, D]
    }


def reference_forward(h, adjs, params):
    """Pure-JAX (f32) mirror of the torch forward, for a sanity check."""
    P = adjs.shape[0]
    embeds, scores = [], []
    for p in range(P):
        out = adjs[p] @ (h @ params["w_gcn_t"][p]) + params["b_gcn"][p]
        a = params["alpha"][p]
        emb = jnp.where(out >= 0.0, out, a * out)
        embeds.append(emb)
        sp = jnp.tanh(emb @ params["w_fc_t"] + params["b_fc"]).mean(axis=0)
        scores.append(jnp.sum(params["att"][0] * sp))
    beta = jax.nn.softmax(jnp.stack(scores))
    z = sum(embeds[p] * beta[p] for p in range(P))
    return z, beta


if __name__ == "__main__":
    P, N, D = 3, 777, 32        # non-multiple N exercises padding + row masking
    key = jax.random.PRNGKey(0)
    k_h, k_adj, k_p = jax.random.split(key, 3)

    h = jax.random.normal(k_h, (N, D), jnp.float32)
    # random dense adjacencies, row-normalized (GCN-style)
    adj_raw = jax.random.uniform(k_adj, (P, N, N), jnp.float32)
    adjs = adj_raw / jnp.sum(adj_raw, axis=-1, keepdims=True)

    params = init_params(k_p, P, D)

    z, beta = mp_encoder_forward(h, adjs, params)
    jax.block_until_ready((z, beta))

    z_ref, beta_ref = reference_forward(h, adjs, params)
    assert z.shape == (N, D) and beta.shape == (P,)
    # bf16 operands with f32 accumulation -> slightly looser tolerance vs f32 ref
    assert jnp.allclose(z, z_ref, atol=1e-2, rtol=1e-2), "z_mp mismatch"
    assert jnp.allclose(beta, beta_ref, atol=5e-3, rtol=5e-3), "beta mismatch"

    print("KERNEL_OK")
</pallas_src>

<mosaic_0001>
module attributes {stable_mosaic.version = 11 : i64} {
  func.func @_xw_kernel(%arg0: i32, %arg1: memref<512x128xbf16, #tpu.memory_space<vmem>>, %arg2: memref<128x384xbf16, #tpu.memory_space<vmem>>, %arg3: memref<512x384xbf16, #tpu.memory_space<vmem>>) attributes {dimension_semantics = [#tpu.dimension_semantics<parallel>], iteration_bounds = array<i64: 2>, scalar_prefetch = 0 : i64, scratch_operands = 0 : i64, tpu.core_type = #tpu.core_type<tc>, window_params = [{transform_indices = @transform_0, window_bounds = array<i64: 512, 128>}, {pipeline_mode = #tpu.pipeline_mode<synchronous>, transform_indices = @transform_1, window_bounds = array<i64: 128, 384>}, {transform_indices = @transform_2, window_bounds = array<i64: 512, 384>}]} {
    %c0 = arith.constant 0 : index
    %c0_0 = arith.constant 0 : index
    %0 = vector.load %arg1[%c0, %c0_0] : memref<512x128xbf16, #tpu.memory_space<vmem>>, vector<512x128xbf16>
    %c0_1 = arith.constant 0 : index
    %c0_2 = arith.constant 0 : index
    %1 = vector.load %arg2[%c0_1, %c0_2] : memref<128x384xbf16, #tpu.memory_space<vmem>>, vector<128x384xbf16>
    %cst = arith.constant dense<0.000000e+00> : vector<512x384xf32>
    %2 = tpu.matmul %0, %1, %cst {dimension_numbers = #tpu.dot_dimension_numbers<[1], [0], [0], [1], [0, 0, 1, 1], [], []>} : vector<512x128xbf16>, vector<128x384xbf16>, vector<512x384xf32> -> vector<512x384xf32>
    %3 = arith.truncf %2 : vector<512x384xf32> to vector<512x384xbf16>
    %c0_3 = arith.constant 0 : index
    %c0_4 = arith.constant 0 : index
    %4 = vector.load %arg3[%c0_3, %c0_4] : memref<512x384xbf16, #tpu.memory_space<vmem>>, vector<512x384xbf16>
    tpu.vector_store %arg3[%c0_3, %c0_4], %3 {strides = array<i32>} : memref<512x384xbf16, #tpu.memory_space<vmem>>, vector<512x384xbf16>,
    return
  }
  func.func @transform_0(%arg0: i32) -> (i32, i32) {
    %c0_i32 = arith.constant 0 : i32
    %c0_i32_0 = arith.constant 0 : i32
    return %arg0, %c0_i32 : i32, i32
  }
  func.func @transform_1(%arg0: i32) -> (i32, i32) {
    %c0_i32 = arith.constant 0 : i32
    %c0_i32_0 = arith.constant 0 : i32
    %c0_i32_1 = arith.constant 0 : i32
    return %c0_i32, %c0_i32_0 : i32, i32
  }
  func.func @transform_2(%arg0: i32) -> (i32, i32) {
    %c0_i32 = arith.constant 0 : i32
    %c0_i32_0 = arith.constant 0 : i32
    return %arg0, %c0_i32 : i32, i32
  }
}

</mosaic_0001>

<llo_original>
// kernel: tpu_custom_call.1
$region0: #{tpu_custom_call.1}
  #allocation0 [shape = 'u32[]', space=smem, size = 0x4, offset = 0x4, fixed_abs, tag = 'smem constant byte address 0x4 - core index']
  #allocation1 [shape = 'u32[72,128]{1,0:T(1,128)}', space=vmem, size = 0x9000, scoped, tag = 'internal scratch']
  %s0 = inlined_call_operand.hbm [shape: bf16[1024,128], index: 0, kind: input, shape index: {}]
  %s1 = inlined_call_operand.hbm [shape: bf16[128,384], index: 1, kind: input, shape index: {}]
  %s2 = inlined_call_operand.hbm [shape: bf16[1024,384], index: 2, kind: output, shape index: {}]
  %s3 = sld [smem:[#allocation0]]
  $region49: #{tpu_custom_call.1} parent=0
    _
  %s5 = ssub.s32 1, %s3
  %s6 = scalar_select 0, %s5, %s3
  $region1: #{tpu_custom_call.1} parent=0
    #allocation2 [shape = 'u8[262144]{0}', space=vmem, size = 0x40000, scoped, tag = 'input window, operand 0']
    #allocation3 [shape = 's32[2]{0}', space=sflag, size = 0x8, scoped, tag = 'scoped memory for tpu_custom_call.1']
    #allocation4 [shape = 's32[2]{0}', space=sflag, size = 0x8, scoped, tag = 'scoped memory for tpu_custom_call.1']
    #allocation5 [shape = 'u8[98304]{0}', space=vmem, size = 0x18000, scoped, tag = 'input window, operand 1, single buffered']
    #allocation6 [shape = 's32[1]{0}', space=sflag, size = 0x4, scoped, tag = 'scoped memory for tpu_custom_call.1']
    #allocation7 [shape = 'u8[786432]{0}', space=vmem, size = 0xc0000, scoped, tag = 'output window, operand 0']
    %7 = vsyncpa [#allocation3], 0
    %s8 = scalar_lea.sflag [#allocation3], 1
    %9 = vsyncpa %s8, 0
    %10 = vsyncpa [#allocation6], 0
    %11 = vsyncpa [#allocation4], 0
    %s12 = scalar_lea.sflag [#allocation4], 1
    %13 = vsyncpa %s12, 0
    loop: start=0, step=1, limit=4
    $region2: #{tpu_custom_call.1} parent=1 // loop_pre_header
      _
    $region3: #{tpu_custom_call.1} parent=1 // loop_header
      %s15 = sphi 0, %s19
      %p16 = scmp.ge.s32.totalorder %s15, 4
      %s25 = sphi 0, %s27
      %s28 = sphi 0, %s25
      %s29 = sphi 0, %s28
      %s45 = sphi 0, %s29
      %s49 = sphi 0, %s49
      %s51 = sphi 0, %s49
      %s52 = sphi 0, %s51
      %s66 = sphi 0, %s52
      %s72 = sphi 0, %s74
      %s75 = sphi 0, %s72
      %s76 = sphi 0, %s75
      %s92 = sphi 0, %s76
    $region4: #{tpu_custom_call.1} parent=1 // loop_header_branch
      %18 = sbr.rel (%p16) target = $region8
    $region5: #{tpu_custom_call.1} parent=1 // loop_body
      %s20 = ssub.s32 %s15, 1
      %s21 = ssub.s32 %s15, 2
      %s22 = sadd.s32 %s15, 1
      %s23 = ssub.s32 %s15, %s22
      %p24 = scmp.eq.s32.totalorder %s23, 0
      %s26 = sadd.s32 %s25, 1
      %s27 = scalar_select %p24, %s25, %s26
      %p30 = pneg %p24
      %p31 = scmp.eq.s32.totalorder %s15, 1
      %p32 = por %p30, %p31
      %p33 = scmp.ne.s32.totalorder %s25, %s28
      %p34 = scmp.eq.s32.totalorder %s15, 0
      %p35 = por %p33, %p34
      %p36 = scmp.ne.s32.totalorder %s25, %s28
      %p37 = scmp.eq.s32.totalorder %s20, 1
      %p38 = por %p36, %p37
      %p39 = scmp.ne.s32.totalorder %s28, %s29
      %p40 = scmp.eq.s32.totalorder %s20, 0
      %p41 = por %p39, %p40
      %p42 = scmp.ne.s32.totalorder %s28, %s29
      %p43 = scmp.eq.s32.totalorder %s21, 1
      %p44 = por %p42, %p43
      %p46 = scmp.ne.s32.totalorder %s29, %s45
      %p47 = scmp.eq.s32.totalorder %s21, 0
      %p48 = por %p46, %p47
      %s50 = sadd.s32 %s49, 1
      %p53 = scmp.eq.s32.totalorder %s15, 1
      %p54 = scmp.ne.s32.totalorder %s49, %s51
      %p55 = scmp.eq.s32.totalorder %s15, 0
      %p56 = por %p54, %p55
      %p57 = scmp.ne.s32.totalorder %s49, %s51
      %p58 = scmp.eq.s32.totalorder %s20, 1
      %p59 = por %p57, %p58
      %p60 = scmp.ne.s32.totalorder %s51, %s52
      %p61 = scmp.eq.s32.totalorder %s20, 0
      %p62 = por %p60, %p61
      %p63 = scmp.ne.s32.totalorder %s51, %s52
      %p64 = scmp.eq.s32.totalorder %s21, 1
      %p65 = por %p63, %p64
      %p67 = scmp.ne.s32.totalorder %s52, %s66
      %p68 = scmp.eq.s32.totalorder %s21, 0
      %p69 = por %p67, %p68
      %s70 = ssub.s32 %s15, %s22
      %p71 = scmp.eq.s32.totalorder %s70, 0
      %s73 = sadd.s32 %s72, 1
      %s74 = scalar_select %p71, %s72, %s73
      %p77 = pneg %p71
      %p78 = scmp.eq.s32.totalorder %s15, 1
      %p79 = por %p77, %p78
      %p80 = scmp.ne.s32.totalorder %s72, %s75
      %p81 = scmp.eq.s32.totalorder %s15, 0
      %p82 = por %p80, %p81
      %p83 = scmp.ne.s32.totalorder %s72, %s75
      %p84 = scmp.eq.s32.totalorder %s20, 1
      %p85 = por %p83, %p84
      %p86 = scmp.ne.s32.totalorder %s75, %s76
      %p87 = scmp.eq.s32.totalorder %s20, 0
      %p88 = por %p86, %p87
      %p89 = scmp.ne.s32.totalorder %s75, %s76
      %p90 = scmp.eq.s32.totalorder %s21, 1
      %p91 = por %p89, %p90
      %p93 = scmp.ne.s32.totalorder %s76, %s92
      %p94 = scmp.eq.s32.totalorder %s21, 0
      %p95 = por %p93, %p94
      %p96 = scmp.le.s32.totalorder 1, %s15
      %p97 = scmp.lt.s32.totalorder %s15, 3
      %p98 = pnand %p96, %p97
      %p99 = pneg %p98
      // Predicated region
      $region9: #{tpu_custom_call.1} parent=5 // pred_check
        _
      $region10: #{tpu_custom_call.1} parent=5 // pred_check_branch
        %101 = sbr.rel (%p98) target = $region12
      $region11: #{tpu_custom_call.1} parent=5 // pred_region
        %s102 = ssub.s32 %s15, 1
        // Predicated region
        $region13: #{tpu_custom_call.1} parent=11 // pred_check
          %p103 = pneg %p62
        $region14: #{tpu_custom_call.1} parent=11 // pred_check_branch
          %105 = sbr.rel (%p103) target = $region16
        $region15: #{tpu_custom_call.1} parent=11 // pred_region
          %107 = vsyncadd [#allocation6], 0
          %s108 = sshll.u32 %s1, 4
          %s109 = int_to_ptr.hbm [resolvable:$true] %s108
          %s110 = sshll.u32 [#allocation5], 4
          %s111 = int_to_ptr.vmem [resolvable:$true] %s110
          %116 = dma.hbm_to_vmem [thread:$0]  %s109, 3072, %s111, [#allocation6], 192, 192, 12
        $region16: #{tpu_custom_call.1} parent=11 // pred_fallthru
          _
      $region12: #{tpu_custom_call.1} parent=5 // pred_fallthru
        _
      %p117 = scmp.lt.s32.totalorder %s15, 2
      // Predicated region
      $region17: #{tpu_custom_call.1} parent=5 // pred_check
        %p118 = pneg %p117
      $region18: #{tpu_custom_call.1} parent=5 // pred_check_branch
        %120 = sbr.rel (%p118) target = $region20
      $region19: #{tpu_custom_call.1} parent=5 // pred_region
        // Predicated region
        $region21: #{tpu_custom_call.1} parent=19 // pred_check
          %p121 = pneg %p35
        $region22: #{tpu_custom_call.1} parent=19 // pred_check_branch
          %123 = sbr.rel (%p121) target = $region24
        $region23: #{tpu_custom_call.1} parent=19 // pred_region
          %s124 = sand.u32 %s25, 1
          %s125 = scalar_lea.sflag [#allocation3], %s124
          %s126 = sand.u32 %s25, 1
          %s127 = smul.addr %s126, 256
          %s128 = scalar_lea.vmem [#allocation2], %s127
          %s129 = smul.u32 64, %s15
          %131 = vsyncadd %s125, 0
          %s132 = smul.addr %s129, 4
          %s133 = scalar_lea.hbm %s0, %s132
          %s134 = sshll.u32 %s133, 4
          %s135 = int_to_ptr.hbm [resolvable:$true] %s134
          %s136 = sshll.u32 %s128, 4
          %s137 = int_to_ptr.vmem [resolvable:$true] %s136
          %142 = dma.hbm_to_vmem [thread:$0]  %s135, 4096, %s137, %s125, 64, 64, 4
        $region24: #{tpu_custom_call.1} parent=19 // pred_fallthru
          _
      $region20: #{tpu_custom_call.1} parent=5 // pred_fallthru
        _
      %p143 = scmp.le.s32.totalorder 1, %s15
      %p144 = scmp.lt.s32.totalorder %s15, 3
      %p145 = pnand %p143, %p144
      %p146 = pneg %p145
      // Predicated region
      $region25: #{tpu_custom_call.1} parent=5 // pred_check
        _
      $region26: #{tpu_custom_call.1} parent=5 // pred_check_branch
        %148 = sbr.rel (%p145) target = $region28
      $region27: #{tpu_custom_call.1} parent=5 // pred_region
        %s149 = ssub.s32 %s15, 1
        %s150 = sand.u32 %s28, 1
        %s151 = scalar_lea.sflag [#allocation3], %s150
        %s152 = sand.u32 %s28, 1
        %s153 = smul.addr %s152, 256
        %s154 = scalar_lea.vmem [#allocation2], %s153
        // Predicated region
        $region29: #{tpu_custom_call.1} parent=27 // pred_check
          %p155 = pneg %p41
        $region30: #{tpu_custom_call.1} parent=27 // pred_check_branch
          %157 = sbr.rel (%p155) target = $region32
        $region31: #{tpu_custom_call.1} parent=27 // pred_region
          %159 = dma.done %s151, 4096
        $region32: #{tpu_custom_call.1} parent=27 // pred_fallthru
          _
        // Predicated region
        $region33: #{tpu_custom_call.1} parent=27 // pred_check
          %p160 = pneg %p62
        $region34: #{tpu_custom_call.1} parent=27 // pred_check_branch
          %162 = sbr.rel (%p160) target = $region36
        $region35: #{tpu_custom_call.1} parent=27 // pred_region
          %164 = dma.done [#allocation6], 3072
        $region36: #{tpu_custom_call.1} parent=27 // pred_fallthru
          _
        %s165 = sand.u32 %s28, 1
        %s166 = scalar_lea.sflag [#allocation3], %s165
        %s167 = sand.u32 %s28, 1
        %s168 = smul.addr %s167, 256
        %s169 = scalar_lea.vmem [#allocation2], %s168
        %p170 = pneg %p41
        %p171 = pneg %p38
        %p172 = pneg %p62
        %p173 = pneg %p59
        %p174 = pneg %p88
        %p175 = pneg %p85
        %s176 = sand.u32 %s75, 1
        %s177 = scalar_lea.sflag [#allocation4], %s176
        %s178 = sand.u32 %s75, 1
        %s179 = smul.addr %s178, 768
        %s180 = scalar_lea.vmem [#allocation7], %s179
        %s181 = smul.u32 64, %s20
        %s182 = smul.u32 64, %s20
        %v183 = vld [vmem:[%s154] sm:$0xf]
        %v184 = vld [vmem:[%s154 + $0x4] sm:$0xf]
        %v185 = vld [vmem:[%s154 + $0x8] sm:$0xf]
        %v186 = vld [vmem:[%s154 + $0xc] sm:$0xf]
        %v187 = vld [vmem:[%s154 + $0x10] sm:$0xf]
        %v188 = vld [vmem:[%s154 + $0x14] sm:$0xf]
        %v189 = vld [vmem:[%s154 + $0x18] sm:$0xf]
        %v190 = vld [vmem:[%s154 + $0x1c] sm:$0xf]
        %v191 = vld [vmem:[%s154 + $0x20] sm:$0xf]
        %v192 = vld [vmem:[%s154 + $0x24] sm:$0xf]
        %v193 = vld [vmem:[%s154 + $0x28] sm:$0xf]
        %v194 = vld [vmem:[%s154 + $0x2c] sm:$0xf]
        %v195 = vld [vmem:[%s154 + $0x30] sm:$0xf]
        %v196 = vld [vmem:[%s154 + $0x34] sm:$0xf]
        %v197 = vld [vmem:[%s154 + $0x38] sm:$0xf]
        %v198 = vld [vmem:[%s154 + $0x3c] sm:$0xf]
        %v199 = vld [vmem:[%s154 + $0x40] sm:$0xf]
        %v200 = vld [vmem:[%s154 + $0x44] sm:$0xf]
        %v201 = vld [vmem:[%s154 + $0x48] sm:$0xf]
        %v202 = vld [vmem:[%s154 + $0x4c] sm:$0xf]
        %v203 = vld [vmem:[%s154 + $0x50] sm:$0xf]
        %v204 = vld [vmem:[%s154 + $0x54] sm:$0xf]
        %v205 = vld [vmem:[%s154 + $0x58] sm:$0xf]
        %v206 = vld [vmem:[%s154 + $0x5c] sm:$0xf]
        %v207 = vld [vmem:[%s154 + $0x60] sm:$0xf]
        %v208 = vld [vmem:[%s154 + $0x64] sm:$0xf]
        %v209 = vld [vmem:[%s154 + $0x68] sm:$0xf]
        %v210 = vld [vmem:[%s154 + $0x6c] sm:$0xf]
        %v211 = vld [vmem:[%s154 + $0x70] sm:$0xf]
        %v212 = vld [vmem:[%s154 + $0x74] sm:$0xf]
        %v213 = vld [vmem:[%s154 + $0x78] sm:$0xf]
        %v214 = vld [vmem:[%s154 + $0x7c] sm:$0xf]
        %v215 = vld [vmem:[%s154 + $0x80] sm:$0xf]
        %v216 = vld [vmem:[%s154 + $0x84] sm:$0xf]
        %v217 = vld [vmem:[%s154 + $0x88] sm:$0xf]
        %v218 = vld [vmem:[%s154 + $0x8c] sm:$0xf]
        %v219 = vld [vmem:[%s154 + $0x90] sm:$0xf]
        %v220 = vld [vmem:[%s154 + $0x94] sm:$0xf]
        %v221 = vld [vmem:[%s154 + $0x98] sm:$0xf]
        %v222 = vld [vmem:[%s154 + $0x9c] sm:$0xf]
        %v223 = vld [vmem:[%s154 + $0xa0] sm:$0xf]
        %v224 = vld [vmem:[%s154 + $0xa4] sm:$0xf]
        %v225 = vld [vmem:[%s154 + $0xa8] sm:$0xf]
        %v226 = vld [vmem:[%s154 + $0xac] sm:$0xf]
        %v227 = vld [vmem:[%s154 + $0xb0] sm:$0xf]
        %v228 = vld [vmem:[%s154 + $0xb4] sm:$0xf]
        %v229 = vld [vmem:[%s154 + $0xb8] sm:$0xf]
        %v230 = vld [vmem:[%s154 + $0xbc] sm:$0xf]
        %v231 = vld [vmem:[%s154 + $0xc0] sm:$0xf]
        %v232 = vld [vmem:[%s154 + $0xc4] sm:$0xf]
        %v233 = vld [vmem:[%s154 + $0xc8] sm:$0xf]
        %v234 = vld [vmem:[%s154 + $0xcc] sm:$0xf]
        %v235 = vld [vmem:[%s154 + $0xd0] sm:$0xf]
        %v236 = vld [vmem:[%s154 + $0xd4] sm:$0xf]
        %v237 = vld [vmem:[%s154 + $0xd8] sm:$0xf]
        %v238 = vld [vmem:[%s154 + $0xdc] sm:$0xf]
        %v239 = vld [vmem:[%s154 + $0xe0] sm:$0xf]
        %v240 = vld [vmem:[%s154 + $0xe4] sm:$0xf]
        %v241 = vld [vmem:[%s154 + $0xe8] sm:$0xf]
        %v242 = vld [vmem:[%s154 + $0xec] sm:$0xf]
        %v243 = vld [vmem:[%s154 + $0xf0] sm:$0xf]
        %v244 = vld [vmem:[%s154 + $0xf4] sm:$0xf]
        %v245 = vld [vmem:[%s154 + $0xf8] sm:$0xf]
        %v246 = vld [vmem:[%s154 + $0xfc] sm:$0xf]
        %v247 = vld [vmem:[#allocation5] sm:$0xff]
        %v248 = vld [vmem:[#allocation5 + $0x8] sm:$0xf]
        %v249 = vld [vmem:[#allocation5 + $0xc] sm:$0xff]
        %v250 = vld [vmem:[#allocation5 + $0x14] sm:$0xf]
        %v251 = vld [vmem:[#allocation5 + $0x18] sm:$0xff]
        %v252 = vld [vmem:[#allocation5 + $0x20] sm:$0xf]
        %v253 = vld [vmem:[#allocation5 + $0x24] sm:$0xff]
        %v254 = vld [vmem:[#allocation5 + $0x2c] sm:$0xf]
        %v255 = vld [vmem:[#allocation5 + $0x30] sm:$0xff]
        %v256 = vld [vmem:[#allocation5 + $0x38] sm:$0xf]
        %v257 = vld [vmem:[#allocation5 + $0x3c] sm:$0xff]
        %v258 = vld [vmem:[#allocation5 + $0x44] sm:$0xf]
        %v259 = vld [vmem:[#allocation5 + $0x48] sm:$0xff]
        %v260 = vld [vmem:[#allocation5 + $0x50] sm:$0xf]
        %v261 = vld [vmem:[#allocation5 + $0x54] sm:$0xff]
        %v262 = vld [vmem:[#allocation5 + $0x5c] sm:$0xf]
        %v263 = vld [vmem:[#allocation5 + $0x60] sm:$0xff]
        %v264 = vld [vmem:[#allocation5 + $0x68] sm:$0xf]
        %v265 = vld [vmem:[#allocation5 + $0x6c] sm:$0xff]
        %v266 = vld [vmem:[#allocation5 + $0x74] sm:$0xf]
        %v267 = vld [vmem:[#allocation5 + $0x78] sm:$0xff]
        %v268 = vld [vmem:[#allocation5 + $0x80] sm:$0xf]
        %v269 = vld [vmem:[#allocation5 + $0x84] sm:$0xff]
        %v270 = vld [vmem:[#allocation5 + $0x8c] sm:$0xf]
        %v271 = vld [vmem:[#allocation5 + $0x90] sm:$0xff]
        %v272 = vld [vmem:[#allocation5 + $0x98] sm:$0xf]
        %v273 = vld [vmem:[#allocation5 + $0x9c] sm:$0xff]
        %v274 = vld [vmem:[#allocation5 + $0xa4] sm:$0xf]
        %v275 = vld [vmem:[#allocation5 + $0xa8] sm:$0xff]
        %v276 = vld [vmem:[#allocation5 + $0xb0] sm:$0xf]
        %v277 = vld [vmem:[#allocation5 + $0xb4] sm:$0xff]
        %v278 = vld [vmem:[#allocation5 + $0xbc] sm:$0xf]
        %v343 = vunpack.c.l.b16 %v183
        %v344 = vunpack.c.l.b16 %v184
        %v345 = vunpack.c.l.b16 %v185
        %v346 = vunpack.c.l.b16 %v186
        %v347 = vunpack.c.l.b16 %v187
        %v348 = vunpack.c.l.b16 %v188
        %v349 = vunpack.c.l.b16 %v189
        %v350 = vunpack.c.l.b16 %v190
        %v351 = vunpack.c.l.b16 %v191
        %v352 = vunpack.c.l.b16 %v192
        %v353 = vunpack.c.l.b16 %v193
        %v354 = vunpack.c.l.b16 %v194
        %v355 = vunpack.c.l.b16 %v195
        %v356 = vunpack.c.l.b16 %v196
        %v357 = vunpack.c.l.b16 %v197
        %v358 = vunpack.c.l.b16 %v198
        %v359 = vunpack.c.l.b16 %v199
        %v360 = vunpack.c.l.b16 %v200
        %v361 = vunpack.c.l.b16 %v201
        %v362 = vunpack.c.l.b16 %v202
        %v363 = vunpack.c.l.b16 %v203
        %v364 = vunpack.c.l.b16 %v204
        %v365 = vunpack.c.l.b16 %v205
        %v366 = vunpack.c.l.b16 %v206
        %v367 = vunpack.c.l.b16 %v207
        %v368 = vunpack.c.l.b16 %v208
        %v369 = vunpack.c.l.b16 %v209
        %v370 = vunpack.c.l.b16 %v210
        %v371 = vunpack.c.l.b16 %v211
        %v372 = vunpack.c.l.b16 %v212
        %v373 = vunpack.c.l.b16 %v213
        %v374 = vunpack.c.l.b16 %v214
        %v375 = vunpack.c.l.b16 %v215
        %v376 = vunpack.c.l.b16 %v216
        %v377 = vunpack.c.l.b16 %v217
        %v378 = vunpack.c.l.b16 %v218
        %v379 = vunpack.c.l.b16 %v219
        %v380 = vunpack.c.l.b16 %v220
        %v381 = vunpack.c.l.b16 %v221
        %v382 = vunpack.c.l.b16 %v222
        %v383 = vunpack.c.l.b16 %v223
        %v384 = vunpack.c.l.b16 %v224
        %v385 = vunpack.c.l.b16 %v225
        %v386 = vunpack.c.l.b16 %v226
        %v387 = vunpack.c.l.b16 %v227
        %v388 = vunpack.c.l.b16 %v228
        %v389 = vunpack.c.l.b16 %v229
        %v390 = vunpack.c.l.b16 %v230
        %v391 = vunpack.c.l.b16 %v231
        %v392 = vunpack.c.l.b16 %v232
        %v393 = vunpack.c.l.b16 %v233
        %v394 = vunpack.c.l.b16 %v234
        %v395 = vunpack.c.l.b16 %v235
        %v396 = vunpack.c.l.b16 %v236
        %v397 = vunpack.c.l.b16 %v237
        %v398 = vunpack.c.l.b16 %v238
        %v399 = vunpack.c.l.b16 %v239
        %v400 = vunpack.c.l.b16 %v240
        %v401 = vunpack.c.l.b16 %v241
        %v402 = vunpack.c.l.b16 %v242
        %v403 = vunpack.c.l.b16 %v243
        %v404 = vunpack.c.l.b16 %v244
        %v405 = vunpack.c.l.b16 %v245
        %v406 = vunpack.c.l.b16 %v246
        %v407 = vpack.c.b16 %v344, %v343
        %v408 = vpack.c.b16 %v346, %v345
        %v409 = vpack.c.b16 %v348, %v347
        %v410 = vpack.c.b16 %v350, %v349
        %v411 = vpack.c.b16 %v352, %v351
        %v412 = vpack.c.b16 %v354, %v353
        %v413 = vpack.c.b16 %v356, %v355
        %v414 = vpack.c.b16 %v358, %v357
        %v415 = vpack.c.b16 %v360, %v359
        %v416 = vpack.c.b16 %v362, %v361
        %v417 = vpack.c.b16 %v364, %v363
        %v418 = vpack.c.b16 %v366, %v365
        %v419 = vpack.c.b16 %v368, %v367
        %v420 = vpack.c.b16 %v370, %v369
        %v421 = vpack.c.b16 %v372, %v371
        %v422 = vpack.c.b16 %v374, %v373
        %v423 = vpack.c.b16 %v376, %v375
        %v424 = vpack.c.b16 %v378, %v377
        %v425 = vpack.c.b16 %v380, %v379
        %v426 = vpack.c.b16 %v382, %v381
        %v427 = vpack.c.b16 %v384, %v383
        %v428 = vpack.c.b16 %v386, %v385
        %v429 = vpack.c.b16 %v388, %v387
        %v430 = vpack.c.b16 %v390, %v389
        %v431 = vpack.c.b16 %v392, %v391
        %v432 = vpack.c.b16 %v394, %v393
        %v433 = vpack.c.b16 %v396, %v395
        %v434 = vpack.c.b16 %v398, %v397
        %v435 = vpack.c.b16 %v400, %v399
        %v436 = vpack.c.b16 %v402, %v401
        %v437 = vpack.c.b16 %v404, %v403
        %v438 = vpack.c.b16 %v406, %v405
        %v503 = vunpack.c.l.b16 %v247
        %v504 = vunpack.c.h.b16 %v247
        %v505 = vunpack.c.l.b16 %v248
        %v506 = vunpack.c.l.b16 %v249
        %v507 = vunpack.c.h.b16 %v249
        %v508 = vunpack.c.l.b16 %v250
        %v509 = vunpack.c.l.b16 %v251
        %v510 = vunpack.c.h.b16 %v251
        %v511 = vunpack.c.l.b16 %v252
        %v512 = vunpack.c.l.b16 %v253
        %v513 = vunpack.c.h.b16 %v253
        %v514 = vunpack.c.l.b16 %v254
        %v515 = vunpack.c.l.b16 %v255
        %v516 = vunpack.c.h.b16 %v255
        %v517 = vunpack.c.l.b16 %v256
        %v518 = vunpack.c.l.b16 %v257
        %v519 = vunpack.c.h.b16 %v257
        %v520 = vunpack.c.l.b16 %v258
        %v521 = vunpack.c.l.b16 %v259
        %v522 = vunpack.c.h.b16 %v259
        %v523 = vunpack.c.l.b16 %v260
        %v524 = vunpack.c.l.b16 %v261
        %v525 = vunpack.c.h.b16 %v261
        %v526 = vunpack.c.l.b16 %v262
        %v527 = vunpack.c.l.b16 %v263
        %v528 = vunpack.c.h.b16 %v263
        %v529 = vunpack.c.l.b16 %v264
        %v530 = vunpack.c.l.b16 %v265
        %v531 = vunpack.c.h.b16 %v265
        %v532 = vunpack.c.l.b16 %v266
        %v533 = vunpack.c.l.b16 %v267
        %v534 = vunpack.c.h.b16 %v267
        %v535 = vunpack.c.l.b16 %v268
        %v536 = vunpack.c.l.b16 %v269
        %v537 = vunpack.c.h.b16 %v269
        %v538 = vunpack.c.l.b16 %v270
        %v539 = vunpack.c.l.b16 %v271
        %v540 = vunpack.c.h.b16 %v271
        %v541 = vunpack.c.l.b16 %v272
        %v542 = vunpack.c.l.b16 %v273
        %v543 = vunpack.c.h.b16 %v273
        %v544 = vunpack.c.l.b16 %v274
        %v545 = vunpack.c.l.b16 %v275
        %v546 = vunpack.c.h.b16 %v275
        %v547 = vunpack.c.l.b16 %v276
        %v548 = vunpack.c.l.b16 %v277
        %v549 = vunpack.c.h.b16 %v277
        %v550 = vunpack.c.l.b16 %v278
        %v551 = vpack.c.b16 %v506, %v503
        %v552 = vpack.c.b16 %v507, %v504
        %v553 = vpack.c.b16 %v508, %v505
        %v554 = vpack.c.b16 %v512, %v509
        %v555 = vpack.c.b16 %v513, %v510
        %v556 = vpack.c.b16 %v514, %v511
        %v557 = vpack.c.b16 %v518, %v515
        %v558 = vpack.c.b16 %v519, %v516
        %v559 = vpack.c.b16 %v520, %v517
        %v560 = vpack.c.b16 %v524, %v521
        %v561 = vpack.c.b16 %v525, %v522
        %v562 = vpack.c.b16 %v526, %v523
        %v563 = vpack.c.b16 %v530, %v527
        %v564 = vpack.c.b16 %v531, %v528
        %v565 = vpack.c.b16 %v532, %v529
        %v566 = vpack.c.b16 %v536, %v533
        %v567 = vpack.c.b16 %v537, %v534
        %v568 = vpack.c.b16 %v538, %v535
        %v569 = vpack.c.b16 %v542, %v539
        %v570 = vpack.c.b16 %v543, %v540
        %v571 = vpack.c.b16 %v544, %v541
        %v572 = vpack.c.b16 %v548, %v545
        %v573 = vpack.c.b16 %v549, %v546
        %v574 = vpack.c.b16 %v550, %v547
        %599 = vmatpush.bf16.msra.mxu0 %v572
        %600 = vmatpush.bf16.msra.mxu0 %v569
        %601 = vmatpush.bf16.msra.mxu0 %v566
        %602 = vmatpush.bf16.msra.mxu0 %v563
        %603 = vmatpush.bf16.msra.mxu0 %v560
        %604 = vmatpush.bf16.msra.mxu0 %v557
        %605 = vmatpush.bf16.msra.mxu0 %v554
        %606 = vmatpush.bf16.msra.mxu0 %v551
        %607 = vmatmul.bf16.gmra.mxu0 %v407
        %v608 = vpop.f32.mrf.mxu0
        %v609 = vadd.f32 0.0, %v608
        %v610 = vpop.f32.mrf.mxu0
        %v611 = vadd.f32 0.0, %v610
        %612 = vmatmul.bf16.gmra.mxu0 %v408
        %v613 = vpop.f32.mrf.mxu0
        %v614 = vadd.f32 0.0, %v613
        %v615 = vpop.f32.mrf.mxu0
        %v616 = vadd.f32 0.0, %v615
        %617 = vmatmul.bf16.gmra.mxu0 %v409
        %v618 = vpop.f32.mrf.mxu0
        %v619 = vadd.f32 0.0, %v618
        %v620 = vpop.f32.mrf.mxu0
        %v621 = vadd.f32 0.0, %v620
        %622 = vmatmul.bf16.gmra.mxu0 %v410
        %v623 = vpop.f32.mrf.mxu0
        %v624 = vadd.f32 0.0, %v623
        %v625 = vpop.f32.mrf.mxu0
        %v626 = vadd.f32 0.0, %v625
        %627 = vmatmul.bf16.gmra.mxu0 %v411
        %v628 = vpop.f32.mrf.mxu0
        %v629 = vadd.f32 0.0, %v628
        %v630 = vpop.f32.mrf.mxu0
        %v631 = vadd.f32 0.0, %v630
        %632 = vmatmul.bf16.gmra.mxu0 %v412
        %v633 = vpop.f32.mrf.mxu0
        %v634 = vadd.f32 0.0, %v633
        %v635 = vpop.f32.mrf.mxu0
        %v636 = vadd.f32 0.0, %v635
        %637 = vmatmul.bf16.gmra.mxu0 %v413
        %v638 = vpop.f32.mrf.mxu0
        %v639 = vadd.f32 0.0, %v638
        %v640 = vpop.f32.mrf.mxu0
        %v641 = vadd.f32 0.0, %v640
        %642 = vmatmul.bf16.gmra.mxu0 %v414
        %v643 = vpop.f32.mrf.mxu0
        %v644 = vadd.f32 0.0, %v643
        %v645 = vpop.f32.mrf.mxu0
        %v646 = vadd.f32 0.0, %v645
        %647 = vmatmul.bf16.gmra.mxu0 %v415
        %v648 = vpop.f32.mrf.mxu0
        %v649 = vadd.f32 0.0, %v648
        %v650 = vpop.f32.mrf.mxu0
        %v651 = vadd.f32 0.0, %v650
        %652 = vmatmul.bf16.gmra.mxu0 %v416
        %v653 = vpop.f32.mrf.mxu0
        %v654 = vadd.f32 0.0, %v653
        %v655 = vpop.f32.mrf.mxu0
        %v656 = vadd.f32 0.0, %v655
        %657 = vmatmul.bf16.gmra.mxu0 %v417
        %v658 = vpop.f32.mrf.mxu0
        %v659 = vadd.f32 0.0, %v658
        %v660 = vpop.f32.mrf.mxu0
        %v661 = vadd.f32 0.0, %v660
        %662 = vmatmul.bf16.gmra.mxu0 %v418
        %v663 = vpop.f32.mrf.mxu0
        %v664 = vadd.f32 0.0, %v663
        %v665 = vpop.f32.mrf.mxu0
        %v666 = vadd.f32 0.0, %v665
        %667 = vmatmul.bf16.gmra.mxu0 %v419
        %v668 = vpop.f32.mrf.mxu0
        %v669 = vadd.f32 0.0, %v668
        %v670 = vpop.f32.mrf.mxu0
        %v671 = vadd.f32 0.0, %v670
        %672 = vmatmul.bf16.gmra.mxu0 %v420
        %v673 = vpop.f32.mrf.mxu0
        %v674 = vadd.f32 0.0, %v673
        %v675 = vpop.f32.mrf.mxu0
        %v676 = vadd.f32 0.0, %v675
        %677 = vmatmul.bf16.gmra.mxu0 %v421
        %v678 = vpop.f32.mrf.mxu0
        %v679 = vadd.f32 0.0, %v678
        %v680 = vpop.f32.mrf.mxu0
        %v681 = vadd.f32 0.0, %v680
        %682 = vmatmul.bf16.gmra.mxu0 %v422
        %v683 = vpop.f32.mrf.mxu0
        %v684 = vadd.f32 0.0, %v683
        %v685 = vpop.f32.mrf.mxu0
        %v686 = vadd.f32 0.0, %v685
        %687 = vmatmul.bf16.gmra.mxu0 %v423
        %v688 = vpop.f32.mrf.mxu0
        %v689 = vadd.f32 0.0, %v688
        %v690 = vpop.f32.mrf.mxu0
        %v691 = vadd.f32 0.0, %v690
        %692 = vmatmul.bf16.gmra.mxu0 %v424
        %v693 = vpop.f32.mrf.mxu0
        %v694 = vadd.f32 0.0, %v693
        %v695 = vpop.f32.mrf.mxu0
        %v696 = vadd.f32 0.0, %v695
        %697 = vmatmul.bf16.gmra.mxu0 %v425
        %v698 = vpop.f32.mrf.mxu0
        %v699 = vadd.f32 0.0, %v698
        %v700 = vpop.f32.mrf.mxu0
        %v701 = vadd.f32 0.0, %v700
        %702 = vmatmul.bf16.gmra.mxu0 %v426
        %v703 = vpop.f32.mrf.mxu0
        %v704 = vadd.f32 0.0, %v703
        %v705 = vpop.f32.mrf.mxu0
        %v706 = vadd.f32 0.0, %v705
        %707 = vmatmul.bf16.gmra.mxu0 %v427
        %v708 = vpop.f32.mrf.mxu0
        %v709 = vadd.f32 0.0, %v708
        %v710 = vpop.f32.mrf.mxu0
        %v711 = vadd.f32 0.0, %v710
        %712 = vmatmul.bf16.gmra.mxu0 %v428
        %v713 = vpop.f32.mrf.mxu0
        %v714 = vadd.f32 0.0, %v713
        %v715 = vpop.f32.mrf.mxu0
        %v716 = vadd.f32 0.0, %v715
        %717 = vmatmul.bf16.gmra.mxu0 %v429
        %v718 = vpop.f32.mrf.mxu0
        %v719 = vadd.f32 0.0, %v718
        %v720 = vpop.f32.mrf.mxu0
        %v721 = vadd.f32 0.0, %v720
        %722 = vmatmul.bf16.gmra.mxu0 %v430
        %v723 = vpop.f32.mrf.mxu0
        %v724 = vadd.f32 0.0, %v723
        %v725 = vpop.f32.mrf.mxu0
        %v726 = vadd.f32 0.0, %v725
        %727 = vmatmul.bf16.gmra.mxu0 %v431
        %v728 = vpop.f32.mrf.mxu0
        %v729 = vadd.f32 0.0, %v728
        %v730 = vpop.f32.mrf.mxu0
        %v731 = vadd.f32 0.0, %v730
        %732 = vmatmul.bf16.gmra.mxu0 %v432
        %v733 = vpop.f32.mrf.mxu0
        %v734 = vadd.f32 0.0, %v733
        %v735 = vpop.f32.mrf.mxu0
        %v736 = vadd.f32 0.0, %v735
        %737 = vmatmul.bf16.gmra.mxu0 %v433
        %v738 = vpop.f32.mrf.mxu0
        %v739 = vadd.f32 0.0, %v738
        %v740 = vpop.f32.mrf.mxu0
        %v741 = vadd.f32 0.0, %v740
        %742 = vmatmul.bf16.gmra.mxu0 %v434
        %v743 = vpop.f32.mrf.mxu0
        %v744 = vadd.f32 0.0, %v743
        %v745 = vpop.f32.mrf.mxu0
        %v746 = vadd.f32 0.0, %v745
        %747 = vmatmul.bf16.gmra.mxu0 %v435
        %v748 = vpop.f32.mrf.mxu0
        %v749 = vadd.f32 0.0, %v748
        %v750 = vpop.f32.mrf.mxu0
        %v751 = vadd.f32 0.0, %v750
        %752 = vmatmul.bf16.gmra.mxu0 %v436
        %v753 = vpop.f32.mrf.mxu0
        %v754 = vadd.f32 0.0, %v753
        %v755 = vpop.f32.mrf.mxu0
        %v756 = vadd.f32 0.0, %v755
        %757 = vmatmul.bf16.gmra.mxu0 %v437
        %v758 = vpop.f32.mrf.mxu0
        %v759 = vadd.f32 0.0, %v758
        %v760 = vpop.f32.mrf.mxu0
        %v761 = vadd.f32 0.0, %v760
        %762 = vmatmul.bf16.gmra.mxu0 %v438
        %v763 = vpop.f32.mrf.mxu0
        %v764 = vadd.f32 0.0, %v763
        %v765 = vpop.f32.mrf.mxu0
        %v766 = vadd.f32 0.0, %v765
        %767 = vdwg.mxu0
        %768 = vmatpush.bf16.msra.mxu0 %v573
        %769 = vmatpush.bf16.msra.mxu0 %v570
        %770 = vmatpush.bf16.msra.mxu0 %v567
        %771 = vmatpush.bf16.msra.mxu0 %v564
        %772 = vmatpush.bf16.msra.mxu0 %v561
        %773 = vmatpush.bf16.msra.mxu0 %v558
        %774 = vmatpush.bf16.msra.mxu0 %v555
        %775 = vmatpush.bf16.msra.mxu0 %v552
        %776 = vmatmul.bf16.gmra.mxu0 %v407
        %v777 = vpop.f32.mrf.mxu0
        %v778 = vadd.f32 0.0, %v777
        %v779 = vpop.f32.mrf.mxu0
        %v780 = vadd.f32 0.0, %v779
        %781 = vmatmul.bf16.gmra.mxu0 %v408
        %v782 = vpop.f32.mrf.mxu0
        %v783 = vadd.f32 0.0, %v782
        %v784 = vpop.f32.mrf.mxu0
        %v785 = vadd.f32 0.0, %v784
        %786 = vmatmul.bf16.gmra.mxu0 %v409
        %v787 = vpop.f32.mrf.mxu0
        %v788 = vadd.f32 0.0, %v787
        %v789 = vpop.f32.mrf.mxu0
        %v790 = vadd.f32 0.0, %v789
        %791 = vmatmul.bf16.gmra.mxu0 %v410
        %v792 = vpop.f32.mrf.mxu0
        %v793 = vadd.f32 0.0, %v792
        %v794 = vpop.f32.mrf.mxu0
        %v795 = vadd.f32 0.0, %v794
        %796 = vmatmul.bf16.gmra.mxu0 %v411
        %v797 = vpop.f32.mrf.mxu0
        %v798 = vadd.f32 0.0, %v797
        %v799 = vpop.f32.mrf.mxu0
        %v800 = vadd.f32 0.0, %v799
        %801 = vmatmul.bf16.gmra.mxu0 %v412
        %v802 = vpop.f32.mrf.mxu0
        %v803 = vadd.f32 0.0, %v802
        %v804 = vpop.f32.mrf.mxu0
        %v805 = vadd.f32 0.0, %v804
        %806 = vmatmul.bf16.gmra.mxu0 %v413
        %v807 = vpop.f32.mrf.mxu0
        %v808 = vadd.f32 0.0, %v807
        %v809 = vpop.f32.mrf.mxu0
        %v810 = vadd.f32 0.0, %v809
        %811 = vmatmul.bf16.gmra.mxu0 %v414
        %v812 = vpop.f32.mrf.mxu0
        %v813 = vadd.f32 0.0, %v812
        %v814 = vpop.f32.mrf.mxu0
        %v815 = vadd.f32 0.0, %v814
        %816 = vmatmul.bf16.gmra.mxu0 %v415
        %v817 = vpop.f32.mrf.mxu0
        %v818 = vadd.f32 0.0, %v817
        %v819 = vpop.f32.mrf.mxu0
        %v820 = vadd.f32 0.0, %v819
        %821 = vmatmul.bf16.gmra.mxu0 %v416
        %v822 = vpop.f32.mrf.mxu0
        %v823 = vadd.f32 0.0, %v822
        %v824 = vpop.f32.mrf.mxu0
        %v825 = vadd.f32 0.0, %v824
        %826 = vmatmul.bf16.gmra.mxu0 %v417
        %v827 = vpop.f32.mrf.mxu0
        %v828 = vadd.f32 0.0, %v827
        %v829 = vpop.f32.mrf.mxu0
        %v830 = vadd.f32 0.0, %v829
        %831 = vmatmul.bf16.gmra.mxu0 %v418
        %v832 = vpop.f32.mrf.mxu0
        %v833 = vadd.f32 0.0, %v832
        %v834 = vpop.f32.mrf.mxu0
        %v835 = vadd.f32 0.0, %v834
        %836 = vmatmul.bf16.gmra.mxu0 %v419
        %v837 = vpop.f32.mrf.mxu0
        %v838 = vadd.f32 0.0, %v837
        %v839 = vpop.f32.mrf.mxu0
        %v840 = vadd.f32 0.0, %v839
        %841 = vmatmul.bf16.gmra.mxu0 %v420
        %v842 = vpop.f32.mrf.mxu0
        %v843 = vadd.f32 0.0, %v842
        %v844 = vpop.f32.mrf.mxu0
        %v845 = vadd.f32 0.0, %v844
        %846 = vmatmul.bf16.gmra.mxu0 %v421
        %v847 = vpop.f32.mrf.mxu0
        %v848 = vadd.f32 0.0, %v847
        %v849 = vpop.f32.mrf.mxu0
        %v850 = vadd.f32 0.0, %v849
        %851 = vmatmul.bf16.gmra.mxu0 %v422
        %v852 = vpop.f32.mrf.mxu0
        %v853 = vadd.f32 0.0, %v852
        %v854 = vpop.f32.mrf.mxu0
        %v855 = vadd.f32 0.0, %v854
        %856 = vmatmul.bf16.gmra.mxu0 %v423
        %v857 = vpop.f32.mrf.mxu0
        %v858 = vadd.f32 0.0, %v857
        %v859 = vpop.f32.mrf.mxu0
        %v860 = vadd.f32 0.0, %v859
        %861 = vmatmul.bf16.gmra.mxu0 %v424
        %v862 = vpop.f32.mrf.mxu0
        %v863 = vadd.f32 0.0, %v862
        %v864 = vpop.f32.mrf.mxu0
        %v865 = vadd.f32 0.0, %v864
        %866 = vmatmul.bf16.gmra.mxu0 %v425
        %v867 = vpop.f32.mrf.mxu0
        %v868 = vadd.f32 0.0, %v867
        %v869 = vpop.f32.mrf.mxu0
        %v870 = vadd.f32 0.0, %v869
        %871 = vmatmul.bf16.gmra.mxu0 %v426
        %v872 = vpop.f32.mrf.mxu0
        %v873 = vadd.f32 0.0, %v872
        %v874 = vpop.f32.mrf.mxu0
        %v875 = vadd.f32 0.0, %v874
        %876 = vmatmul.bf16.gmra.mxu0 %v427
        %v877 = vpop.f32.mrf.mxu0
        %v878 = vadd.f32 0.0, %v877
        %v879 = vpop.f32.mrf.mxu0
        %v880 = vadd.f32 0.0, %v879
        %881 = vmatmul.bf16.gmra.mxu0 %v428
        %v882 = vpop.f32.mrf.mxu0
        %v883 = vadd.f32 0.0, %v882
        %v884 = vpop.f32.mrf.mxu0
        %v885 = vadd.f32 0.0, %v884
        %886 = vmatmul.bf16.gmra.mxu0 %v429
        %v887 = vpop.f32.mrf.mxu0
        %v888 = vadd.f32 0.0, %v887
        %v889 = vpop.f32.mrf.mxu0
        %v890 = vadd.f32 0.0, %v889
        %891 = vmatmul.bf16.gmra.mxu0 %v430
        %v892 = vpop.f32.mrf.mxu0
        %v893 = vadd.f32 0.0, %v892
        %v894 = vpop.f32.mrf.mxu0
        %v895 = vadd.f32 0.0, %v894
        %896 = vmatmul.bf16.gmra.mxu0 %v431
        %v897 = vpop.f32.mrf.mxu0
        %v898 = vadd.f32 0.0, %v897
        %v899 = vpop.f32.mrf.mxu0
        %v900 = vadd.f32 0.0, %v899
        %901 = vmatmul.bf16.gmra.mxu0 %v432
        %v902 = vpop.f32.mrf.mxu0
        %v903 = vadd.f32 0.0, %v902
        %v904 = vpop.f32.mrf.mxu0
        %v905 = vadd.f32 0.0, %v904
        %906 = vmatmul.bf16.gmra.mxu0 %v433
        %v907 = vpop.f32.mrf.mxu0
        %v908 = vadd.f32 0.0, %v907
        %v909 = vpop.f32.mrf.mxu0
        %v910 = vadd.f32 0.0, %v909
        %911 = vmatmul.bf16.gmra.mxu0 %v434
        %v912 = vpop.f32.mrf.mxu0
        %v913 = vadd.f32 0.0, %v912
        %v914 = vpop.f32.mrf.mxu0
        %v915 = vadd.f32 0.0, %v914
        %916 = vmatmul.bf16.gmra.mxu0 %v435
        %v917 = vpop.f32.mrf.mxu0
        %v918 = vadd.f32 0.0, %v917
        %v919 = vpop.f32.mrf.mxu0
        %v920 = vadd.f32 0.0, %v919
        %921 = vmatmul.bf16.gmra.mxu0 %v436
        %v922 = vpop.f32.mrf.mxu0
        %v923 = vadd.f32 0.0, %v922
        %v924 = vpop.f32.mrf.mxu0
        %v925 = vadd.f32 0.0, %v924
        %926 = vmatmul.bf16.gmra.mxu0 %v437
        %v927 = vpop.f32.mrf.mxu0
        %v928 = vadd.f32 0.0, %v927
        %v929 = vpop.f32.mrf.mxu0
        %v930 = vadd.f32 0.0, %v929
        %931 = vmatmul.bf16.gmra.mxu0 %v438
        %v932 = vpop.f32.mrf.mxu0
        %v933 = vadd.f32 0.0, %v932
        %v934 = vpop.f32.mrf.mxu0
        %v935 = vadd.f32 0.0, %v934
        %936 = vdwg.mxu0
        %937 = vmatpush.bf16.msra.mxu0 %v574
        %938 = vmatpush.bf16.msra.mxu0 %v571
        %939 = vmatpush.bf16.msra.mxu0 %v568
        %940 = vmatpush.bf16.msra.mxu0 %v565
        %941 = vmatpush.bf16.msra.mxu0 %v562
        %942 = vmatpush.bf16.msra.mxu0 %v559
        %943 = vmatpush.bf16.msra.mxu0 %v556
        %944 = vmatpush.bf16.msra.mxu0 %v553
        %945 = vmatmul.bf16.gmra.mxu0 %v407
        %v946 = vpop.f32.mrf.mxu0
        %v947 = vadd.f32 0.0, %v946
        %v948 = vpop.f32.mrf.mxu0
        %v949 = vadd.f32 0.0, %v948
        %950 = vmatmul.bf16.gmra.mxu0 %v408
        %v951 = vpop.f32.mrf.mxu0
        %v952 = vadd.f32 0.0, %v951
        %v953 = vpop.f32.mrf.mxu0
        %v954 = vadd.f32 0.0, %v953
        %955 = vmatmul.bf16.gmra.mxu0 %v409
        %v956 = vpop.f32.mrf.mxu0
        %v957 = vadd.f32 0.0, %v956
        %v958 = vpop.f32.mrf.mxu0
        %v959 = vadd.f32 0.0, %v958
        %960 = vmatmul.bf16.gmra.mxu0 %v410
        %v961 = vpop.f32.mrf.mxu0
        %v962 = vadd.f32 0.0, %v961
        %v963 = vpop.f32.mrf.mxu0
        %v964 = vadd.f32 0.0, %v963
        %965 = vmatmul.bf16.gmra.mxu0 %v411
        %v966 = vpop.f32.mrf.mxu0
        %v967 = vadd.f32 0.0, %v966
        %v968 = vpop.f32.mrf.mxu0
        %v969 = vadd.f32 0.0, %v968
        %970 = vmatmul.bf16.gmra.mxu0 %v412
        %v971 = vpop.f32.mrf.mxu0
        %v972 = vadd.f32 0.0, %v971
        %v973 = vpop.f32.mrf.mxu0
        %v974 = vadd.f32 0.0, %v973
        %975 = vmatmul.bf16.gmra.mxu0 %v413
        %v976 = vpop.f32.mrf.mxu0
        %v977 = vadd.f32 0.0, %v976
        %v978 = vpop.f32.mrf.mxu0
        %v979 = vadd.f32 0.0, %v978
        %980 = vmatmul.bf16.gmra.mxu0 %v414
        %v981 = vpop.f32.mrf.mxu0
        %v982 = vadd.f32 0.0, %v981
        %v983 = vpop.f32.mrf.mxu0
        %v984 = vadd.f32 0.0, %v983
        %985 = vmatmul.bf16.gmra.mxu0 %v415
        %v986 = vpop.f32.mrf.mxu0
        %v987 = vadd.f32 0.0, %v986
        %v988 = vpop.f32.mrf.mxu0
        %v989 = vadd.f32 0.0, %v988
        %990 = vmatmul.bf16.gmra.mxu0 %v416
        %v991 = vpop.f32.mrf.mxu0
        %v992 = vadd.f32 0.0, %v991
        %v993 = vpop.f32.mrf.mxu0
        %v994 = vadd.f32 0.0, %v993
        %995 = vmatmul.bf16.gmra.mxu0 %v417
        %v996 = vpop.f32.mrf.mxu0
        %v997 = vadd.f32 0.0, %v996
        %v998 = vpop.f32.mrf.mxu0
        %v999 = vadd.f32 0.0, %v998
        %1000 = vmatmul.bf16.gmra.mxu0 %v418
        %v1001 = vpop.f32.mrf.mxu0
        %v1002 = vadd.f32 0.0, %v1001
        %v1003 = vpop.f32.mrf.mxu0
        %v1004 = vadd.f32 0.0, %v1003
        %1005 = vmatmul.bf16.gmra.mxu0 %v419
        %v1006 = vpop.f32.mrf.mxu0
        %v1007 = vadd.f32 0.0, %v1006
        %v1008 = vpop.f32.mrf.mxu0
        %v1009 = vadd.f32 0.0, %v1008
        %1010 = vmatmul.bf16.gmra.mxu0 %v420
        %v1011 = vpop.f32.mrf.mxu0
        %v1012 = vadd.f32 0.0, %v1011
        %v1013 = vpop.f32.mrf.mxu0
        %v1014 = vadd.f32 0.0, %v1013
        %1015 = vmatmul.bf16.gmra.mxu0 %v421
        %v1016 = vpop.f32.mrf.mxu0
        %v1017 = vadd.f32 0.0, %v1016
        %v1018 = vpop.f32.mrf.mxu0
        %v1019 = vadd.f32 0.0, %v1018
        %1020 = vmatmul.bf16.gmra.mxu0 %v422
        %v1021 = vpop.f32.mrf.mxu0
        %v1022 = vadd.f32 0.0, %v1021
        %v1023 = vpop.f32.mrf.mxu0
        %v1024 = vadd.f32 0.0, %v1023
        %1025 = vmatmul.bf16.gmra.mxu0 %v423
        %v1026 = vpop.f32.mrf.mxu0
        %v1027 = vadd.f32 0.0, %v1026
        %v1028 = vpop.f32.mrf.mxu0
        %v1029 = vadd.f32 0.0, %v1028
        %1030 = vmatmul.bf16.gmra.mxu0 %v424
        %v1031 = vpop.f32.mrf.mxu0
        %v1032 = vadd.f32 0.0, %v1031
        %v1033 = vpop.f32.mrf.mxu0
        %v1034 = vadd.f32 0.0, %v1033
        %1035 = vmatmul.bf16.gmra.mxu0 %v425
        %v1036 = vpop.f32.mrf.mxu0
        %v1037 = vadd.f32 0.0, %v1036
        %v1038 = vpop.f32.mrf.mxu0
        %v1039 = vadd.f32 0.0, %v1038
        %1040 = vmatmul.bf16.gmra.mxu0 %v426
        %v1041 = vpop.f32.mrf.mxu0
        %v1042 = vadd.f32 0.0, %v1041
        %v1043 = vpop.f32.mrf.mxu0
        %v1044 = vadd.f32 0.0, %v1043
        %1045 = vmatmul.bf16.gmra.mxu0 %v427
        %v1046 = vpop.f32.mrf.mxu0
        %v1047 = vadd.f32 0.0, %v1046
        %v1048 = vpop.f32.mrf.mxu0
        %v1049 = vadd.f32 0.0, %v1048
        %1050 = vmatmul.bf16.gmra.mxu0 %v428
        %v1051 = vpop.f32.mrf.mxu0
        %v1052 = vadd.f32 0.0, %v1051
        %v1053 = vpop.f32.mrf.mxu0
        %v1054 = vadd.f32 0.0, %v1053
        %1055 = vmatmul.bf16.gmra.mxu0 %v429
        %v1056 = vpop.f32.mrf.mxu0
        %v1057 = vadd.f32 0.0, %v1056
        %v1058 = vpop.f32.mrf.mxu0
        %v1059 = vadd.f32 0.0, %v1058
        %1060 = vmatmul.bf16.gmra.mxu0 %v430
        %v1061 = vpop.f32.mrf.mxu0
        %v1062 = vadd.f32 0.0, %v1061
        %v1063 = vpop.f32.mrf.mxu0
        %v1064 = vadd.f32 0.0, %v1063
        %1065 = vmatmul.bf16.gmra.mxu0 %v431
        %v1066 = vpop.f32.mrf.mxu0
        %v1067 = vadd.f32 0.0, %v1066
        %v1068 = vpop.f32.mrf.mxu0
        %v1069 = vadd.f32 0.0, %v1068
        %1070 = vmatmul.bf16.gmra.mxu0 %v432
        %v1071 = vpop.f32.mrf.mxu0
        %v1072 = vadd.f32 0.0, %v1071
        %v1073 = vpop.f32.mrf.mxu0
        %v1074 = vadd.f32 0.0, %v1073
        %1075 = vmatmul.bf16.gmra.mxu0 %v433
        %v1076 = vpop.f32.mrf.mxu0
        %v1077 = vadd.f32 0.0, %v1076
        %v1078 = vpop.f32.mrf.mxu0
        %v1079 = vadd.f32 0.0, %v1078
        %1080 = vmatmul.bf16.gmra.mxu0 %v434
        %v1081 = vpop.f32.mrf.mxu0
        %v1082 = vadd.f32 0.0, %v1081
        %v1083 = vpop.f32.mrf.mxu0
        %v1084 = vadd.f32 0.0, %v1083
        %1085 = vmatmul.bf16.gmra.mxu0 %v435
        %v1086 = vpop.f32.mrf.mxu0
        %v1087 = vadd.f32 0.0, %v1086
        %v1088 = vpop.f32.mrf.mxu0
        %v1089 = vadd.f32 0.0, %v1088
        %1090 = vmatmul.bf16.gmra.mxu0 %v436
        %v1091 = vpop.f32.mrf.mxu0
        %v1092 = vadd.f32 0.0, %v1091
        %v1093 = vpop.f32.mrf.mxu0
        %v1094 = vadd.f32 0.0, %v1093
        %1095 = vmatmul.bf16.gmra.mxu0 %v437
        %v1096 = vpop.f32.mrf.mxu0
        %v1097 = vadd.f32 0.0, %v1096
        %v1098 = vpop.f32.mrf.mxu0
        %v1099 = vadd.f32 0.0, %v1098
        %1100 = vmatmul.bf16.gmra.mxu0 %v438
        %v1101 = vpop.f32.mrf.mxu0
        %v1102 = vadd.f32 0.0, %v1101
        %v1103 = vpop.f32.mrf.mxu0
        %v1104 = vadd.f32 0.0, %v1103
        %1105 = vdwg.mxu0
        %v1106 = vpack.c.bf16 %v778, %v609
        %v1107 = vpack.c.bf16 %v947, %v947
        %v1108 = vpack.c.bf16 %v780, %v611
        %v1109 = vpack.c.bf16 %v949, %v949
        %v1110 = vpack.c.bf16 %v783, %v614
        %v1111 = vpack.c.bf16 %v952, %v952
        %v1112 = vpack.c.bf16 %v785, %v616
        %v1113 = vpack.c.bf16 %v954, %v954
        %v1114 = vpack.c.bf16 %v788, %v619
        %v1115 = vpack.c.bf16 %v957, %v957
        %v1116 = vpack.c.bf16 %v790, %v621
        %v1117 = vpack.c.bf16 %v959, %v959
        %v1118 = vpack.c.bf16 %v793, %v624
        %v1119 = vpack.c.bf16 %v962, %v962
        %v1120 = vpack.c.bf16 %v795, %v626
        %v1121 = vpack.c.bf16 %v964, %v964
        %v1122 = vpack.c.bf16 %v798, %v629
        %v1123 = vpack.c.bf16 %v967, %v967
        %v1124 = vpack.c.bf16 %v800, %v631
        %v1125 = vpack.c.bf16 %v969, %v969
        %v1126 = vpack.c.bf16 %v803, %v634
        %v1127 = vpack.c.bf16 %v972, %v972
        %v1128 = vpack.c.bf16 %v805, %v636
        %v1129 = vpack.c.bf16 %v974, %v974
        %v1130 = vpack.c.bf16 %v808, %v639
        %v1131 = vpack.c.bf16 %v977, %v977
        %v1132 = vpack.c.bf16 %v810, %v641
        %v1133 = vpack.c.bf16 %v979, %v979
        %v1134 = vpack.c.bf16 %v813, %v644
        %v1135 = vpack.c.bf16 %v982, %v982
        %v1136 = vpack.c.bf16 %v815, %v646
        %v1137 = vpack.c.bf16 %v984, %v984
        %v1138 = vpack.c.bf16 %v818, %v649
        %v1139 = vpack.c.bf16 %v987, %v987
        %v1140 = vpack.c.bf16 %v820, %v651
        %v1141 = vpack.c.bf16 %v989, %v989
        %v1142 = vpack.c.bf16 %v823, %v654
        %v1143 = vpack.c.bf16 %v992, %v992
        %v1144 = vpack.c.bf16 %v825, %v656
        %v1145 = vpack.c.bf16 %v994, %v994
        %v1146 = vpack.c.bf16 %v828, %v659
        %v1147 = vpack.c.bf16 %v997, %v997
        %v1148 = vpack.c.bf16 %v830, %v661
        %v1149 = vpack.c.bf16 %v999, %v999
        %v1150 = vpack.c.bf16 %v833, %v664
        %v1151 = vpack.c.bf16 %v1002, %v1002
        %v1152 = vpack.c.bf16 %v835, %v666
        %v1153 = vpack.c.bf16 %v1004, %v1004
        %v1154 = vpack.c.bf16 %v838, %v669
        %v1155 = vpack.c.bf16 %v1007, %v1007
        %v1156 = vpack.c.bf16 %v840, %v671
        %v1157 = vpack.c.bf16 %v1009, %v1009
        %v1158 = vpack.c.bf16 %v843, %v674
        %v1159 = vpack.c.bf16 %v1012, %v1012
        %v1160 = vpack.c.bf16 %v845, %v676
        %v1161 = vpack.c.bf16 %v1014, %v1014
        %v1162 = vpack.c.bf16 %v848, %v679
        %v1163 = vpack.c.bf16 %v1017, %v1017
        %v1164 = vpack.c.bf16 %v850, %v681
        %v1165 = vpack.c.bf16 %v1019, %v1019
        %v1166 = vpack.c.bf16 %v853, %v684
        %v1167 = vpack.c.bf16 %v1022, %v1022
        %v1168 = vpack.c.bf16 %v855, %v686
        %v1169 = vpack.c.bf16 %v1024, %v1024
        %v1170 = vpack.c.bf16 %v858, %v689
        %v1171 = vpack.c.bf16 %v1027, %v1027
        %v1172 = vpack.c.bf16 %v860, %v691
        %v1173 = vpack.c.bf16 %v1029, %v1029
        %v1174 = vpack.c.bf16 %v863, %v694
        %v1175 = vpack.c.bf16 %v1032, %v1032
        %v1176 = vpack.c.bf16 %v865, %v696
        %v1177 = vpack.c.bf16 %v1034, %v1034
        %v1178 = vpack.c.bf16 %v868, %v699
        %v1179 = vpack.c.bf16 %v1037, %v1037
        %v1180 = vpack.c.bf16 %v870, %v701
        %v1181 = vpack.c.bf16 %v1039, %v1039
        %v1182 = vpack.c.bf16 %v873, %v704
        %v1183 = vpack.c.bf16 %v1042, %v1042
        %v1184 = vpack.c.bf16 %v875, %v706
        %v1185 = vpack.c.bf16 %v1044, %v1044
        %v1186 = vpack.c.bf16 %v878, %v709
        %v1187 = vpack.c.bf16 %v1047, %v1047
        %v1188 = vpack.c.bf16 %v880, %v711
        %v1189 = vpack.c.bf16 %v1049, %v1049
        %v1190 = vpack.c.bf16 %v883, %v714
        %v1191 = vpack.c.bf16 %v1052, %v1052
        %v1192 = vpack.c.bf16 %v885, %v716
        %v1193 = vpack.c.bf16 %v1054, %v1054
        %v1194 = vpack.c.bf16 %v888, %v719
        %v1195 = vpack.c.bf16 %v1057, %v1057
        %v1196 = vpack.c.bf16 %v890, %v721
        %v1197 = vpack.c.bf16 %v1059, %v1059
        %v1198 = vpack.c.bf16 %v893, %v724
        %v1199 = vpack.c.bf16 %v1062, %v1062
        %v1200 = vpack.c.bf16 %v895, %v726
        %v1201 = vpack.c.bf16 %v1064, %v1064
        %v1202 = vpack.c.bf16 %v898, %v729
        %v1203 = vpack.c.bf16 %v1067, %v1067
        %v1204 = vpack.c.bf16 %v900, %v731
        %v1205 = vpack.c.bf16 %v1069, %v1069
        %v1206 = vpack.c.bf16 %v903, %v734
        %v1207 = vpack.c.bf16 %v1072, %v1072
        %v1208 = vpack.c.bf16 %v905, %v736
        %v1209 = vpack.c.bf16 %v1074, %v1074
        %v1210 = vpack.c.bf16 %v908, %v739
        %v1211 = vpack.c.bf16 %v1077, %v1077
        %v1212 = vpack.c.bf16 %v910, %v741
        %v1213 = vpack.c.bf16 %v1079, %v1079
        %v1214 = vpack.c.bf16 %v913, %v744
        %v1215 = vpack.c.bf16 %v1082, %v1082
        %v1216 = vpack.c.bf16 %v915, %v746
        %v1217 = vpack.c.bf16 %v1084, %v1084
        %v1218 = vpack.c.bf16 %v918, %v749
        %v1219 = vpack.c.bf16 %v1087, %v1087
        %v1220 = vpack.c.bf16 %v920, %v751
        %v1221 = vpack.c.bf16 %v1089, %v1089
        %v1222 = vpack.c.bf16 %v923, %v754
        %v1223 = vpack.c.bf16 %v1092, %v1092
        %v1224 = vpack.c.bf16 %v925, %v756
        %v1225 = vpack.c.bf16 %v1094, %v1094
        %v1226 = vpack.c.bf16 %v928, %v759
        %v1227 = vpack.c.bf16 %v1097, %v1097
        %v1228 = vpack.c.bf16 %v930, %v761
        %v1229 = vpack.c.bf16 %v1099, %v1099
        %v1230 = vpack.c.bf16 %v933, %v764
        %v1231 = vpack.c.bf16 %v1102, %v1102
        %v1232 = vpack.c.bf16 %v935, %v766
        %v1233 = vpack.c.bf16 %v1104, %v1104
        %1234 = vst [vmem:[%s180] sm:$0xff] %v1106
        %1235 = vst [vmem:[%s180 + $0x8] sm:$0xf] %v1107
        %1236 = vst [vmem:[%s180 + $0xc] sm:$0xff] %v1108
        %1237 = vst [vmem:[%s180 + $0x14] sm:$0xf] %v1109
        %1238 = vst [vmem:[%s180 + $0x18] sm:$0xff] %v1110
        %1239 = vst [vmem:[%s180 + $0x20] sm:$0xf] %v1111
        %1240 = vst [vmem:[%s180 + $0x24] sm:$0xff] %v1112
        %1241 = vst [vmem:[%s180 + $0x2c] sm:$0xf] %v1113
        %1242 = vst [vmem:[%s180 + $0x30] sm:$0xff] %v1114
        %1243 = vst [vmem:[%s180 + $0x38] sm:$0xf] %v1115
        %1244 = vst [vmem:[%s180 + $0x3c] sm:$0xff] %v1116
        %1245 = vst [vmem:[%s180 + $0x44] sm:$0xf] %v1117
        %1246 = vst [vmem:[%s180 + $0x48] sm:$0xff] %v1118
        %1247 = vst [vmem:[%s180 + $0x50] sm:$0xf] %v1119
        %1248 = vst [vmem:[%s180 + $0x54] sm:$0xff] %v1120
        %1249 = vst [vmem:[%s180 + $0x5c] sm:$0xf] %v1121
        %1250 = vst [vmem:[%s180 + $0x60] sm:$0xff] %v1122
        %1251 = vst [vmem:[%s180 + $0x68] sm:$0xf] %v1123
        %1252 = vst [vmem:[%s180 + $0x6c] sm:$0xff] %v1124
        %1253 = vst [vmem:[%s180 + $0x74] sm:$0xf] %v1125
        %1254 = vst [vmem:[%s180 + $0x78] sm:$0xff] %v1126
        %1255 = vst [vmem:[%s180 + $0x80] sm:$0xf] %v1127
        %1256 = vst [vmem:[%s180 + $0x84] sm:$0xff] %v1128
        %1257 = vst [vmem:[%s180 + $0x8c] sm:$0xf] %v1129
        %1258 = vst [vmem:[%s180 + $0x90] sm:$0xff] %v1130
        %1259 = vst [vmem:[%s180 + $0x98] sm:$0xf] %v1131
        %1260 = vst [vmem:[%s180 + $0x9c] sm:$0xff] %v1132
        %1261 = vst [vmem:[%s180 + $0xa4] sm:$0xf] %v1133
        %1262 = vst [vmem:[%s180 + $0xa8] sm:$0xff] %v1134
        %1263 = vst [vmem:[%s180 + $0xb0] sm:$0xf] %v1135
        %1264 = vst [vmem:[%s180 + $0xb4] sm:$0xff] %v1136
        %1265 = vst [vmem:[%s180 + $0xbc] sm:$0xf] %v1137
        %1266 = vst [vmem:[%s180 + $0xc0] sm:$0xff] %v1138
        %1267 = vst [vmem:[%s180 + $0xc8] sm:$0xf] %v1139
        %1268 = vst [vmem:[%s180 + $0xcc] sm:$0xff] %v1140
        %1269 = vst [vmem:[%s180 + $0xd4] sm:$0xf] %v1141
        %1270 = vst [vmem:[%s180 + $0xd8] sm:$0xff] %v1142
        %1271 = vst [vmem:[%s180 + $0xe0] sm:$0xf] %v1143
        %1272 = vst [vmem:[%s180 + $0xe4] sm:$0xff] %v1144
        %1273 = vst [vmem:[%s180 + $0xec] sm:$0xf] %v1145
        %1274 = vst [vmem:[%s180 + $0xf0] sm:$0xff] %v1146
        %1275 = vst [vmem:[%s180 + $0xf8] sm:$0xf] %v1147
        %1276 = vst [vmem:[%s180 + $0xfc] sm:$0xff] %v1148
        %1277 = vst [vmem:[%s180 + $0x104] sm:$0xf] %v1149
        %1278 = vst [vmem:[%s180 + $0x108] sm:$0xff] %v1150
        %1279 = vst [vmem:[%s180 + $0x110] sm:$0xf] %v1151
        %1280 = vst [vmem:[%s180 + $0x114] sm:$0xff] %v1152
        %1281 = vst [vmem:[%s180 + $0x11c] sm:$0xf] %v1153
        %1282 = vst [vmem:[%s180 + $0x120] sm:$0xff] %v1154
        %1283 = vst [vmem:[%s180 + $0x128] sm:$0xf] %v1155
        %1284 = vst [vmem:[%s180 + $0x12c] sm:$0xff] %v1156
        %1285 = vst [vmem:[%s180 + $0x134] sm:$0xf] %v1157
        %1286 = vst [vmem:[%s180 + $0x138] sm:$0xff] %v1158
        %1287 = vst [vmem:[%s180 + $0x140] sm:$0xf] %v1159
        %1288 = vst [vmem:[%s180 + $0x144] sm:$0xff] %v1160
        %1289 = vst [vmem:[%s180 + $0x14c] sm:$0xf] %v1161
        %1290 = vst [vmem:[%s180 + $0x150] sm:$0xff] %v1162
        %1291 = vst [vmem:[%s180 + $0x158] sm:$0xf] %v1163
        %1292 = vst [vmem:[%s180 + $0x15c] sm:$0xff] %v1164
        %1293 = vst [vmem:[%s180 + $0x164] sm:$0xf] %v1165
        %1294 = vst [vmem:[%s180 + $0x168] sm:$0xff] %v1166
        %1295 = vst [vmem:[%s180 + $0x170] sm:$0xf] %v1167
        %1296 = vst [vmem:[%s180 + $0x174] sm:$0xff] %v1168
        %1297 = vst [vmem:[%s180 + $0x17c] sm:$0xf] %v1169
        %1298 = vst [vmem:[%s180 + $0x180] sm:$0xff] %v1170
        %1299 = vst [vmem:[%s180 + $0x188] sm:$0xf] %v1171
        %1300 = vst [vmem:[%s180 + $0x18c] sm:$0xff] %v1172
        %1301 = vst [vmem:[%s180 + $0x194] sm:$0xf] %v1173
        %1302 = vst [vmem:[%s180 + $0x198] sm:$0xff] %v1174
        %1303 = vst [vmem:[%s180 + $0x1a0] sm:$0xf] %v1175
        %1304 = vst [vmem:[%s180 + $0x1a4] sm:$0xff] %v1176
        %1305 = vst [vmem:[%s180 + $0x1ac] sm:$0xf] %v1177
        %1306 = vst [vmem:[%s180 + $0x1b0] sm:$0xff] %v1178
        %1307 = vst [vmem:[%s180 + $0x1b8] sm:$0xf] %v1179
        %1308 = vst [vmem:[%s180 + $0x1bc] sm:$0xff] %v1180
        %1309 = vst [vmem:[%s180 + $0x1c4] sm:$0xf] %v1181
        %1310 = vst [vmem:[%s180 + $0x1c8] sm:$0xff] %v1182
        %1311 = vst [vmem:[%s180 + $0x1d0] sm:$0xf] %v1183
        %1312 = vst [vmem:[%s180 + $0x1d4] sm:$0xff] %v1184
        %1313 = vst [vmem:[%s180 + $0x1dc] sm:$0xf] %v1185
        %1314 = vst [vmem:[%s180 + $0x1e0] sm:$0xff] %v1186
        %1315 = vst [vmem:[%s180 + $0x1e8] sm:$0xf] %v1187
        %1316 = vst [vmem:[%s180 + $0x1ec] sm:$0xff] %v1188
        %1317 = vst [vmem:[%s180 + $0x1f4] sm:$0xf] %v1189
        %1318 = vst [vmem:[%s180 + $0x1f8] sm:$0xff] %v1190
        %1319 = vst [vmem:[%s180 + $0x200] sm:$0xf] %v1191
        %1320 = vst [vmem:[%s180 + $0x204] sm:$0xff] %v1192
        %1321 = vst [vmem:[%s180 + $0x20c] sm:$0xf] %v1193
        %1322 = vst [vmem:[%s180 + $0x210] sm:$0xff] %v1194
        %1323 = vst [vmem:[%s180 + $0x218] sm:$0xf] %v1195
        %1324 = vst [vmem:[%s180 + $0x21c] sm:$0xff] %v1196
        %1325 = vst [vmem:[%s180 + $0x224] sm:$0xf] %v1197
        %1326 = vst [vmem:[%s180 + $0x228] sm:$0xff] %v1198
        %1327 = vst [vmem:[%s180 + $0x230] sm:$0xf] %v1199
        %1328 = vst [vmem:[%s180 + $0x234] sm:$0xff] %v1200
        %1329 = vst [vmem:[%s180 + $0x23c] sm:$0xf] %v1201
        %1330 = vst [vmem:[%s180 + $0x240] sm:$0xff] %v1202
        %1331 = vst [vmem:[%s180 + $0x248] sm:$0xf] %v1203
        %1332 = vst [vmem:[%s180 + $0x24c] sm:$0xff] %v1204
        %1333 = vst [vmem:[%s180 + $0x254] sm:$0xf] %v1205
        %1334 = vst [vmem:[%s180 + $0x258] sm:$0xff] %v1206
        %1335 = vst [vmem:[%s180 + $0x260] sm:$0xf] %v1207
        %1336 = vst [vmem:[%s180 + $0x264] sm:$0xff] %v1208
        %1337 = vst [vmem:[%s180 + $0x26c] sm:$0xf] %v1209
        %1338 = vst [vmem:[%s180 + $0x270] sm:$0xff] %v1210
        %1339 = vst [vmem:[%s180 + $0x278] sm:$0xf] %v1211
        %1340 = vst [vmem:[%s180 + $0x27c] sm:$0xff] %v1212
        %1341 = vst [vmem:[%s180 + $0x284] sm:$0xf] %v1213
        %1342 = vst [vmem:[%s180 + $0x288] sm:$0xff] %v1214
        %1343 = vst [vmem:[%s180 + $0x290] sm:$0xf] %v1215
        %1344 = vst [vmem:[%s180 + $0x294] sm:$0xff] %v1216
        %1345 = vst [vmem:[%s180 + $0x29c] sm:$0xf] %v1217
        %1346 = vst [vmem:[%s180 + $0x2a0] sm:$0xff] %v1218
        %1347 = vst [vmem:[%s180 + $0x2a8] sm:$0xf] %v1219
        %1348 = vst [vmem:[%s180 + $0x2ac] sm:$0xff] %v1220
        %1349 = vst [vmem:[%s180 + $0x2b4] sm:$0xf] %v1221
        %1350 = vst [vmem:[%s180 + $0x2b8] sm:$0xff] %v1222
        %1351 = vst [vmem:[%s180 + $0x2c0] sm:$0xf] %v1223
        %1352 = vst [vmem:[%s180 + $0x2c4] sm:$0xff] %v1224
        %1353 = vst [vmem:[%s180 + $0x2cc] sm:$0xf] %v1225
        %1354 = vst [vmem:[%s180 + $0x2d0] sm:$0xff] %v1226
        %1355 = vst [vmem:[%s180 + $0x2d8] sm:$0xf] %v1227
        %1356 = vst [vmem:[%s180 + $0x2dc] sm:$0xff] %v1228
        %1357 = vst [vmem:[%s180 + $0x2e4] sm:$0xf] %v1229
        %1358 = vst [vmem:[%s180 + $0x2e8] sm:$0xff] %v1230
        %1359 = vst [vmem:[%s180 + $0x2f0] sm:$0xf] %v1231
        %1360 = vst [vmem:[%s180 + $0x2f4] sm:$0xff] %v1232
        %1361 = vst [vmem:[%s180 + $0x2fc] sm:$0xf] %v1233
        %s1362 = sand.u32 %s75, 1
        %s1363 = scalar_lea.sflag [#allocation4], %s1362
        %s1364 = sand.u32 %s75, 1
        %s1365 = smul.addr %s1364, 768
        %s1366 = scalar_lea.vmem [#allocation7], %s1365
        // Predicated region
        $region37: #{tpu_custom_call.1} parent=27 // pred_check
          %p1367 = pneg %p85
        $region38: #{tpu_custom_call.1} parent=27 // pred_check_branch
          %1369 = sbr.rel (%p1367) target = $region40
        $region39: #{tpu_custom_call.1} parent=27 // pred_region
          %s1370 = smul.u32 64, %s20
          %1372 = vsyncadd %s1363, 0
          %s1373 = smul.addr %s1370, 3
          %s1374 = smul.addr %s1373, 4
          %s1375 = scalar_lea.hbm %s2, %s1374
          %s1376 = sshll.u32 %s1366, 4
          %s1377 = int_to_ptr.vmem [resolvable:$true] %s1376
          %s1378 = sshll.u32 %s1375, 4
          %s1379 = int_to_ptr.hbm [resolvable:$true] %s1378
          %1384 = dma.vmem_to_hbm [thread:$0]  %s1377, 12288, %s1379, %s1363, 192, 192, 12
        $region40: #{tpu_custom_call.1} parent=27 // pred_fallthru
          _
      $region28: #{tpu_custom_call.1} parent=5 // pred_fallthru
        _
      %p1385 = scmp.le.s32.totalorder 2, %s15
      // Predicated region
      $region41: #{tpu_custom_call.1} parent=5 // pred_check
        %p1386 = pneg %p1385
      $region42: #{tpu_custom_call.1} parent=5 // pred_check_branch
        %1388 = sbr.rel (%p1386) target = $region44
      $region43: #{tpu_custom_call.1} parent=5 // pred_region
        %s1389 = ssub.s32 %s15, 2
        // Predicated region
        $region45: #{tpu_custom_call.1} parent=43 // pred_check
          %p1390 = pneg %p91
        $region46: #{tpu_custom_call.1} parent=43 // pred_check_branch
          %1392 = sbr.rel (%p1390) target = $region48
        $region47: #{tpu_custom_call.1} parent=43 // pred_region
          %s1393 = sand.u32 %s76, 1
          %s1394 = scalar_lea.sflag [#allocation4], %s1393
          %s1395 = sand.u32 %s76, 1
          %s1396 = smul.addr %s1395, 768
          %s1397 = scalar_lea.vmem [#allocation7], %s1396
          %1399 = dma.done %s1394, 12288
        $region48: #{tpu_custom_call.1} parent=43 // pred_fallthru
          _
      $region44: #{tpu_custom_call.1} parent=5 // pred_fallthru
        _
    $region6: #{tpu_custom_call.1} parent=1 // loop_footer
      %s19 = sadd.s32 1, %s15
    $region7: #{tpu_custom_call.1} parent=1 // loop_footer_branch
      %14 = sbr.rel target = $region3
    $region8: #{tpu_custom_call.1} parent=1 // loop_exit
      _
    %1400 = vsyncpa [#allocation3], 1
    %s1401 = scalar_lea.sflag [#allocation3], 1
    %1402 = vsyncpa %s1401, 1
    %1403 = vsyncpa [#allocation6], 1
    %1404 = vsyncpa [#allocation4], 1
    %s1405 = scalar_lea.sflag [#allocation4], 1
    %1406 = vsyncpa %s1405, 1

</llo_original>
